<compile_context>
chip_gen: v6e
topology: v6e:2x2x1
jax: 0.10.0
libtpu: 0.0.40
codegen_flags: <defaults>
</compile_context>

<pallas_src>
import jax
import jax.numpy as jnp
from jax.experimental import pallas as pl
from jax.experimental.pallas import tpu as pltpu


# ---------------- Pallas kernel ----------------

def ccnn2_kernel(x_ref, w_ref, b_ref, o_ref):
    # x_ref : (16, BLOCK)  boards along lanes; rows 0:9 hold the flattened 3x3 board
    # w_ref : (16, 16)     fused (W_lin @ W_conv), valid region (9, 9)
    # b_ref : (16, 1)      linear bias, valid rows 0:9 (rest zero)
    # o_ref : (16, BLOCK)  tanh(W @ X + b); valid rows 0:9
    z = jnp.dot(w_ref[...], x_ref[...], preferred_element_type=jnp.float32)
    o_ref[...] = jnp.tanh(z + b_ref[...])


# ---------------- Parameter prep (done once, outside the per-step path) ----------------

def prepare_params(conv_w, lin_w, lin_b):
    """Fuse conv1+linear and pre-pad to TPU-friendly tiles. Redo when params change."""
    w_conv = jnp.reshape(conv_w.astype(jnp.float32), (16, 9))   # conv == 9->16 matvec
    w_lin = lin_w.astype(jnp.float32)                           # (9, 16)
    w_fused = w_lin @ w_conv                                    # (9, 9): z = W @ x_col + b

    w_p = jnp.zeros((16, 16), jnp.float32).at[:9, :9].set(w_fused)
    b_p = jnp.zeros((16, 1), jnp.float32).at[:9, 0].set(lin_b.astype(jnp.float32))
    return w_p, b_p


# ---------------- Block-size choice ----------------

_MIN_BLOCK = 128    # lane dim must be a multiple of 128
_MAX_BLOCK = 2048   # ~0.5 MiB/step double-buffered; safe on all generations


def _pick_block(batch):
    """Boards per grid step: large tiles, but keep >=2 'parallel' steps when possible
    so v7x can shard the grid over both TensorCores."""
    if batch <= 2 * _MIN_BLOCK:
        return _MIN_BLOCK
    half = -(-batch // 2)                       # ceil(batch / 2)
    block = -(-half // _MIN_BLOCK) * _MIN_BLOCK  # round up to multiple of 128
    return min(_MAX_BLOCK, block)


# ---------------- Batched forward (batch along lanes) ----------------

def ccnn2_forward_batched(states, w_p, b_p):
    """states: (B, 3, 3) or (B, 9); returns (B, 9) f32 == tanh(linear(conv(state)))."""
    B = states.shape[0]
    x = jnp.reshape(states.astype(jnp.float32), (B, 9)).T        # (9, B): boards along lanes
    block = _pick_block(B)
    b_pad = pl.cdiv(B, block) * block
    x_p = jnp.pad(x, ((0, 16 - 9), (0, b_pad - B)))              # (16, b_pad)

    out_p = pl.pallas_call(
        ccnn2_kernel,
        out_shape=jax.ShapeDtypeStruct((16, b_pad), jnp.float32),
        grid=(b_pad // block,),
        in_specs=[
            pl.BlockSpec((16, block), lambda i: (0, i)),   # X tile: boards i*block..(i+1)*block
            pl.BlockSpec((16, 16), lambda i: (0, 0)),      # fused weight (resident)
            pl.BlockSpec((16, 1), lambda i: (0, 0)),       # bias (resident)
        ],
        out_specs=pl.BlockSpec((16, block), lambda i: (0, i)),
        compiler_params=pltpu.CompilerParams(
            dimension_semantics=("parallel",)),             # lets v7x shard over both TCs
    )(x_p, w_p, b_p)

    # Lane-transposed layout -> the valid slab is tiny (9 x B f32).
    return out_p[:9, :B].T


# ---------------- Single-state forward (matches the PyTorch module) ----------------

def ccnn2_forward(state, w_p, b_p):
    """state: any array with 9 elements (e.g. (1,3,3)); returns (9,) f32."""
    x = jnp.reshape(state.astype(jnp.float32), (1, 9))
    return ccnn2_forward_batched(x, w_p, b_p)[0]


# ---------------- Deterministic parameter init & plain-JAX reference ----------------

def init_params(key):
    k1, k2, k3 = jax.random.split(key, 3)
    conv_w = jax.random.normal(k1, (16, 1, 3, 3), jnp.float32) * 0.1   # Conv2d(1,16,3,bias=False)
    lin_w = jax.random.normal(k2, (9, 16), jnp.float32) * 0.1          # Linear(16,9).weight
    lin_b = jax.random.normal(k3, (9,), jnp.float32) * 0.1             # Linear(16,9).bias
    return conv_w, lin_w, lin_b


def reference_forward(state, conv_w, lin_w, lin_b):
    """Unfused plain-JAX reference matching the PyTorch forward."""
    x = jnp.reshape(state.astype(jnp.float32), (9,))
    h = jnp.reshape(conv_w, (16, 9)) @ x          # conv: 3x3 kernel on 3x3 input
    z = lin_w @ h + lin_b
    return jnp.tanh(z)


if __name__ == "__main__":
    key = jax.random.PRNGKey(0)
    kp, kx, kb = jax.random.split(key, 3)
    conv_w, lin_w, lin_b = init_params(kp)

    # Constant weights fused + padded once (outside the per-step path).
    w_p, b_p = prepare_params(conv_w, lin_w, lin_b)

    # --- single state, exactly the module's forward ---
    state = jax.random.normal(kx, (1, 3, 3), jnp.float32)
    out = jax.block_until_ready(ccnn2_forward(state, w_p, b_p))
    ref = reference_forward(state, conv_w, lin_w, lin_b)
    assert out.shape == (9,)
    assert jnp.max(jnp.abs(out - ref)) < 1e-5

    # --- batched path (boards along lanes; 2 parallel grid steps at B=256) ---
    B = 256
    states = jax.random.normal(kb, (B, 3, 3), jnp.float32)
    out_b = jax.block_until_ready(ccnn2_forward_batched(states, w_p, b_p))
    ref_b = jax.vmap(lambda s: reference_forward(s, conv_w, lin_w, lin_b))(states)
    assert out_b.shape == (B, 9)
    assert jnp.max(jnp.abs(out_b - ref_b)) < 1e-5

    print("KERNEL_OK")
</pallas_src>

<mosaic_0001>
module attributes {stable_mosaic.version = 11 : i64} {
  func.func @ccnn2_kernel(%arg0: i32, %arg1: memref<16x128xf32, #tpu.memory_space<vmem>>, %arg2: memref<16x16xf32, #tpu.memory_space<vmem>>, %arg3: memref<16x1xf32, #tpu.memory_space<vmem>>, %arg4: memref<16x128xf32, #tpu.memory_space<vmem>>) attributes {dimension_semantics = [#tpu.dimension_semantics<parallel>], iteration_bounds = array<i64: 1>, scalar_prefetch = 0 : i64, scratch_operands = 0 : i64, tpu.core_type = #tpu.core_type<tc>, window_params = [{transform_indices = @transform_0, window_bounds = array<i64: 16, 128>}, {pipeline_mode = #tpu.pipeline_mode<synchronous>, transform_indices = @transform_1, window_bounds = array<i64: 16, 16>}, {pipeline_mode = #tpu.pipeline_mode<synchronous>, transform_indices = @transform_2, window_bounds = array<i64: 16, 1>}, {transform_indices = @transform_3, window_bounds = array<i64: 16, 128>}]} {
    %c0 = arith.constant 0 : index
    %c0_0 = arith.constant 0 : index
    %0 = vector.load %arg2[%c0, %c0_0] : memref<16x16xf32, #tpu.memory_space<vmem>>, vector<16x16xf32>
    %c0_1 = arith.constant 0 : index
    %c0_2 = arith.constant 0 : index
    %1 = vector.load %arg1[%c0_1, %c0_2] : memref<16x128xf32, #tpu.memory_space<vmem>>, vector<16x128xf32>
    %cst = arith.constant dense<0.000000e+00> : vector<16x128xf32>
    %2 = tpu.matmul %0, %1, %cst {dimension_numbers = #tpu.dot_dimension_numbers<[1], [0], [0], [1], [0, 0, 1, 1], [], []>} : vector<16x16xf32>, vector<16x128xf32>, vector<16x128xf32> -> vector<16x128xf32>
    %c0_3 = arith.constant 0 : index
    %c0_4 = arith.constant 0 : index
    %3 = vector.load %arg3[%c0_3, %c0_4] : memref<16x1xf32, #tpu.memory_space<vmem>>, vector<16x1xf32>
    %4 = vector.broadcast %3 : vector<16x1xf32> to vector<16x128xf32>
    %5 = arith.addf %2, %4 : vector<16x128xf32>
    %6 = math.tanh %5 : vector<16x128xf32>
    %c0_5 = arith.constant 0 : index
    %c0_6 = arith.constant 0 : index
    %7 = vector.load %arg4[%c0_5, %c0_6] : memref<16x128xf32, #tpu.memory_space<vmem>>, vector<16x128xf32>
    tpu.vector_store %arg4[%c0_5, %c0_6], %6 {strides = array<i32>} : memref<16x128xf32, #tpu.memory_space<vmem>>, vector<16x128xf32>,
    return
  }
  func.func @transform_0(%arg0: i32) -> (i32, i32) {
    %c0_i32 = arith.constant 0 : i32
    %c0_i32_0 = arith.constant 0 : i32
    return %c0_i32, %arg0 : i32, i32
  }
  func.func @transform_1(%arg0: i32) -> (i32, i32) {
    %c0_i32 = arith.constant 0 : i32
    %c0_i32_0 = arith.constant 0 : i32
    %c0_i32_1 = arith.constant 0 : i32
    return %c0_i32, %c0_i32_0 : i32, i32
  }
  func.func @transform_2(%arg0: i32) -> (i32, i32) {
    %c0_i32 = arith.constant 0 : i32
    %c0_i32_0 = arith.constant 0 : i32
    %c0_i32_1 = arith.constant 0 : i32
    return %c0_i32, %c0_i32_0 : i32, i32
  }
  func.func @transform_3(%arg0: i32) -> (i32, i32) {
    %c0_i32 = arith.constant 0 : i32
    %c0_i32_0 = arith.constant 0 : i32
    return %c0_i32, %arg0 : i32, i32
  }
}

</mosaic_0001>

<llo_original>
// kernel: tpu_custom_call.1
$region0: #{tpu_custom_call.1}
  #allocation0 [shape = 'u32[]', space=smem, size = 0x4, offset = 0x4, fixed_abs, tag = 'smem constant byte address 0x4 - core index']
  #allocation1 [shape = 'u32[144,128]{1,0:T(1,128)}', space=vmem, size = 0x12000, scoped, tag = 'internal scratch']
  %s0 = inlined_call_operand.vmem [shape: f32[16,128], index: 0, kind: input, shape index: {}]
  %s1 = inlined_call_operand.hbm [shape: f32[16,16], index: 1, kind: input, shape index: {}]
  %s2 = inlined_call_operand.vmem [shape: f32[16,1], index: 2, kind: input, shape index: {}]
  %s3 = inlined_call_operand.hbm [shape: f32[16,128], index: 3, kind: output, shape index: {}]
  %s4 = sld [smem:[#allocation0]]
  $region26: #{tpu_custom_call.1} parent=0
    _
  %s6 = ssub.s32 1, %s4
  %s7 = scalar_select 0, %s6, %s4
  $region1: #{tpu_custom_call.1} parent=0
    #allocation2 [shape = 'u8[8192]{0}', space=vmem, size = 0x2000, scoped, tag = 'input window, operand 1, single buffered']
    #allocation3 [shape = 's32[1]{0}', space=sflag, size = 0x4, scoped, tag = 'scoped memory for tpu_custom_call.1']
    #allocation4 [shape = 's32[1]{0}', space=sflag, size = 0x4, scoped, tag = 'scoped memory for tpu_custom_call.1']
    #allocation5 [shape = 'u8[8192]{0}', space=vmem, size = 0x2000, scoped, tag = 'output window, operand 0, single buffered']
    %8 = vsyncpa [#allocation3], 0
    %9 = vsyncpa [#allocation4], 0
    // Predicated region
    $region2: #{tpu_custom_call.1} parent=1 // pred_check
      _
    $region3: #{tpu_custom_call.1} parent=1 // pred_check_branch
      %11 = sbr.rel (0) target = $region5
    $region4: #{tpu_custom_call.1} parent=1 // pred_region
      _
    $region5: #{tpu_custom_call.1} parent=1 // pred_fallthru
      _
    // Predicated region
    $region6: #{tpu_custom_call.1} parent=1 // pred_check
      _
    $region7: #{tpu_custom_call.1} parent=1 // pred_check_branch
      %13 = sbr.rel (0) target = $region9
    $region8: #{tpu_custom_call.1} parent=1 // pred_region
      %s15 = ssub.s32 256, 256
      %16 = vsyncadd [#allocation3], %s15
      %s17 = sshll.u32 [#allocation2], 4
      %s18 = int_to_ptr.vmem [resolvable:$true] %s17
      %23 = dma.hbm_to_vmem [thread:$0]  %s1, 256, %s18, [#allocation3], 128, 128, 8
    $region9: #{tpu_custom_call.1} parent=1 // pred_fallthru
      _
    // Predicated region
    $region10: #{tpu_custom_call.1} parent=1 // pred_check
      _
    $region11: #{tpu_custom_call.1} parent=1 // pred_check_branch
      %25 = sbr.rel (0) target = $region13
    $region12: #{tpu_custom_call.1} parent=1 // pred_region
      _
    $region13: #{tpu_custom_call.1} parent=1 // pred_fallthru
      _
    // Predicated region
    $region14: #{tpu_custom_call.1} parent=1 // pred_check
      _
    $region15: #{tpu_custom_call.1} parent=1 // pred_check_branch
      %27 = sbr.rel (0) target = $region17
    $region16: #{tpu_custom_call.1} parent=1 // pred_region
      %28 = dma.done [#allocation3], 256
    $region17: #{tpu_custom_call.1} parent=1 // pred_fallthru
      _
    %v29 = vld [vmem:[#allocation2] sm:$0xff]
    %v30 = vld [vmem:[#allocation2 + $0x8] sm:$0xff]
    %v31 = vld [vmem:[%s0] sm:$0xff]
    %v32 = vld [vmem:[%s0 + $0x8] sm:$0xff]
    %v33 = vld [vmem:[%s2] sm:$0xff]
    %v34 = vld [vmem:[%s2 + $0x8] sm:$0xff]
    %36 = vset.pattern.permute.xlu0 0
    %37 = vperm.xlu0 %36, %v33
    %v38 = vpop.permute.xlu0 %37
    %41 = vset.pattern.permute.xlu0 0
    %42 = vperm.xlu0 %41, %v34
    %v43 = vpop.permute.xlu0 %42
    %vm45 = vcmask 130048
    %v47 = vsel %vm45, %v29, 0
    %v50 = vsel %vm45, %v30, 0
    %52 = vmatprep.subr.mxu0 0.0
    %53 = vmatpush1.msra.mxu0 0.0
    %54 = vmatprep.subr.mxu0 0.0
    %55 = vmatpush1.msra.mxu0 0.0
    %56 = vmatprep.subr.mxu0 0.0
    %57 = vmatpush1.msra.mxu0 0.0
    %58 = vmatprep.subr.mxu0 0.0
    %59 = vmatpush1.msra.mxu0 0.0
    %60 = vmatprep.subr.mxu0 0.0
    %61 = vmatpush1.msra.mxu0 0.0
    %62 = vmatprep.subr.mxu0 0.0
    %63 = vmatpush1.msra.mxu0 0.0
    %64 = vmatprep.subr.mxu0 0.0
    %65 = vmatpush1.msra.mxu0 0.0
    %66 = vmatprep.subr.mxu0 0.0
    %67 = vmatpush1.msra.mxu0 0.0
    %68 = vmatprep.subr.mxu0 0.0
    %69 = vmatpush1.msra.mxu0 0.0
    %70 = vmatprep.subr.mxu0 0.0
    %71 = vmatpush1.msra.mxu0 0.0
    %72 = vmatprep.subr.mxu0 0.0
    %73 = vmatpush1.msra.mxu0 0.0
    %74 = vmatprep.subr.mxu0 0.0
    %75 = vmatpush1.msra.mxu0 0.0
    %76 = vmatprep.subr.mxu0 0.0
    %77 = vmatpush1.msra.mxu0 0.0
    %78 = vmatprep.subr.mxu0 0.0
    %79 = vmatpush1.msra.mxu0 0.0
    %80 = vmatprep.subr.mxu0 0.0
    %81 = vmatpush1.msra.mxu0 %v32
    %82 = vmatprep.subr.mxu0 0.0
    %83 = vmatpush1.msra.mxu0 %v31
    %84 = vmatprep.subr.mxu0 0.0
    %85 = vmatpush2.msra.mxu0 0.0
    %86 = vmatprep.subr.mxu0 0.0
    %87 = vmatpush2.msra.mxu0 0.0
    %88 = vmatprep.subr.mxu0 0.0
    %89 = vmatpush2.msra.mxu0 0.0
    %90 = vmatprep.subr.mxu0 0.0
    %91 = vmatpush2.msra.mxu0 0.0
    %92 = vmatprep.subr.mxu0 0.0
    %93 = vmatpush2.msra.mxu0 0.0
    %94 = vmatprep.subr.mxu0 0.0
    %95 = vmatpush2.msra.mxu0 0.0
    %96 = vmatprep.subr.mxu0 0.0
    %97 = vmatpush2.msra.mxu0 0.0
    %98 = vmatprep.subr.mxu0 0.0
    %99 = vmatpush2.msra.mxu0 0.0
    %100 = vmatprep.subr.mxu0 0.0
    %101 = vmatpush2.msra.mxu0 0.0
    %102 = vmatprep.subr.mxu0 0.0
    %103 = vmatpush2.msra.mxu0 0.0
    %104 = vmatprep.subr.mxu0 0.0
    %105 = vmatpush2.msra.mxu0 0.0
    %106 = vmatprep.subr.mxu0 0.0
    %107 = vmatpush2.msra.mxu0 0.0
    %108 = vmatprep.subr.mxu0 0.0
    %109 = vmatpush2.msra.mxu0 0.0
    %110 = vmatprep.subr.mxu0 0.0
    %111 = vmatpush2.msra.mxu0 0.0
    %112 = vmatprep.subr.mxu0 0.0
    %113 = vmatpush2.msra.mxu0 0.0
    %114 = vmatprep.subr.mxu0 0.0
    %115 = vmatpush2.msra.mxu0 0.0
    %116 = vmatprep.mubr.f32.mxu0 0.0
    %117 = vmatmul.mubr.f32.gmra.mxu0 %v47
    %v118 = vpop.f32.mrf.mxu0
    %v119 = vadd.f32 %v38, %v118
    %v120 = vpop.f32.mrf.mxu0
    %121 = vmatprep.mubr.f32.mxu0 0.0
    %122 = vmatmul.mubr.f32.gmra.mxu0 %v50
    %v123 = vpop.f32.mrf.mxu0
    %v124 = vadd.f32 %v43, %v123
    %v125 = vpop.f32.mrf.mxu0
    %126 = vdwg.mxu0
    %v127 = vtanh.pop %v119
    %v128 = vtanh.pop %v124
    %129 = vst [vmem:[#allocation5] sm:$0xff] %v127
    %130 = vst [vmem:[#allocation5 + $0x8] sm:$0xff] %v128
    // Predicated region
    $region18: #{tpu_custom_call.1} parent=1 // pred_check
      _
    $region19: #{tpu_custom_call.1} parent=1 // pred_check_branch
      %132 = sbr.rel (0) target = $region21
    $region20: #{tpu_custom_call.1} parent=1 // pred_region
      %s134 = ssub.s32 256, 256
      %135 = vsyncadd [#allocation4], %s134
      %s136 = sshll.u32 [#allocation5], 4
      %s137 = int_to_ptr.vmem [resolvable:$true] %s136
      %142 = dma.vmem_to_hbm [thread:$0]  %s137, 256, %s3, [#allocation4], 128, 128, 8
    $region21: #{tpu_custom_call.1} parent=1 // pred_fallthru
      _
    // Predicated region
    $region22: #{tpu_custom_call.1} parent=1 // pred_check
      _
    $region23: #{tpu_custom_call.1} parent=1 // pred_check_branch
      %144 = sbr.rel (0) target = $region25
    $region24: #{tpu_custom_call.1} parent=1 // pred_region
      %145 = dma.done [#allocation4], 256
    $region25: #{tpu_custom_call.1} parent=1 // pred_fallthru
      _
    %146 = vsyncpa [#allocation3], 1
    %147 = vsyncpa [#allocation4], 1

</llo_original>
